<compile_context>
chip_gen: v7x
topology: tpu7x:2x2x1
jax: 0.10.0
libtpu: 0.0.40
codegen_flags: <defaults>
</compile_context>

<pallas_src>
import jax
import jax.numpy as jnp
from jax.experimental import pallas as pl
from jax.experimental.pallas import tpu as pltpu

_LANES = 512          # lane-dense slab width (multiple of 128 lanes)
_MAX_TILE_ROWS = 256  # (256, 512) f32 tile = 512 KiB


def _abstract_input_kernel(eps_ref, x_ref, ub_ref, lb_ref):
    """Elementwise: ub = clamp(x + eps, 0, 1), lb = clamp(x - eps, 0, 1)."""
    eps = eps_ref[0]
    x = x_ref[...]
    ub_ref[...] = jnp.clip(x + eps, 0.0, 1.0)
    lb_ref[...] = jnp.clip(x - eps, 0.0, 1.0)


@jax.jit
def _forward_impl(x, eps_arr):
    B, H, W = x.shape
    n_flat = H * W
    n_total = B * n_flat
    dtype = x.dtype

    # ---- layout glue (plain XLA, fused under jit): lane-dense slab --------
    # sublane packing: 8 rows for 32-bit, 16 for 16-bit, 32 for 8-bit dtypes.
    sub = 8 * max(1, 4 // jnp.dtype(dtype).itemsize)
    rows = pl.cdiv(n_total, _LANES)
    rows = ((rows + sub - 1) // sub) * sub
    tile_r = min(_MAX_TILE_ROWS, rows)
    rows = ((rows + tile_r - 1) // tile_r) * tile_r   # grid divides evenly
    n_padded = rows * _LANES

    x_slab = jnp.pad(x.reshape(-1), (0, n_padded - n_total)).reshape(rows, _LANES)

    grid = (rows // tile_r,)
    tile_spec = pl.BlockSpec((tile_r, _LANES), lambda i: (i, 0))

    ub_slab, lb_slab = pl.pallas_call(
        _abstract_input_kernel,
        out_shape=(
            jax.ShapeDtypeStruct((rows, _LANES), dtype),
            jax.ShapeDtypeStruct((rows, _LANES), dtype),
        ),
        grid=grid,
        in_specs=[
            pl.BlockSpec(memory_space=pltpu.MemorySpace.SMEM),  # eps scalar
            tile_spec,
        ],
        out_specs=(tile_spec, tile_spec),
        # Reuse the temporary padded input buffer for `ub`.
        input_output_aliases={1: 0},
        compiler_params=pltpu.CompilerParams(
            dimension_semantics=("parallel",)),
    )(eps_arr, x_slab)

    # Drop the padding and restore the module's (B, H*W) flattened view.
    ub = ub_slab.reshape(-1)[:n_total].reshape(B, n_flat)
    lb = lb_slab.reshape(-1)[:n_total].reshape(B, n_flat)
    return ub, lb


def abstract_input_forward(x, eps):
    """Pallas implementation of AbstractInput.forward.

    Args:
      x:   (B, H, W) array (matches the module's x.dim() == 3 assertion).
      eps: perturbation radius (python float or 0-d array).

    Returns:
      dict with 'input_ub', 'input_lb', 'ub', 'lb' — each (B, H*W), mirroring
      the attributes the PyTorch module stores on `self`.
    """
    assert x.ndim == 3, "Dimension should be 3 in input!"
    eps_arr = jnp.asarray(eps, dtype=x.dtype).reshape(1)
    ub, lb = _forward_impl(x, eps_arr)
    # TODO(synk): the PyTorch module mutates self.* and returns self; we return
    # the computed bounds (ub is already a "clone" of input_ub value-wise).
    return {"input_ub": ub, "input_lb": lb, "ub": ub, "lb": lb}


def _reference(x, eps):
    x_flat = x.reshape(x.shape[0], -1)
    ub = jnp.clip(x_flat + eps, 0.0, 1.0)
    lb = jnp.clip(x_flat - eps, 0.0, 1.0)
    return ub, lb


if __name__ == "__main__":
    eps = 0.1
    key = jax.random.PRNGKey(0)
    # Small 3-D input consistent with the forward's x.dim() == 3 assertion.
    x = jax.random.uniform(key, (2, 16, 16), dtype=jnp.float32)

    out = abstract_input_forward(x, eps)
    jax.block_until_ready(out)

    ref_ub, ref_lb = _reference(x, eps)
    assert out["ub"].shape == (2, 256)
    assert out["lb"].shape == (2, 256)
    assert jnp.allclose(out["ub"], ref_ub, atol=1e-6)
    assert jnp.allclose(out["lb"], ref_lb, atol=1e-6)
    assert jnp.allclose(out["input_ub"], ref_ub, atol=1e-6)
    assert jnp.allclose(out["input_lb"], ref_lb, atol=1e-6)

    # A second eps value reuses the same compiled kernel (eps is an SMEM arg).
    out2 = abstract_input_forward(x, 0.25)
    jax.block_until_ready(out2)
    ref_ub2, ref_lb2 = _reference(x, 0.25)
    assert jnp.allclose(out2["ub"], ref_ub2, atol=1e-6)
    assert jnp.allclose(out2["lb"], ref_lb2, atol=1e-6)

    print("KERNEL_OK")
</pallas_src>

<mosaic_0001>
module attributes {stable_mosaic.version = 11 : i64} {
  func.func @_abstract_input_kernel(%arg0: i32, %arg1: memref<1xf32, #tpu.memory_space<smem>>, %arg2: memref<8x512xf32, #tpu.memory_space<vmem>>, %arg3: memref<8x512xf32, #tpu.memory_space<vmem>>, %arg4: memref<8x512xf32, #tpu.memory_space<vmem>>) attributes {dimension_semantics = [#tpu.dimension_semantics<parallel>], iteration_bounds = array<i64: 1>, scalar_prefetch = 0 : i64, scratch_operands = 0 : i64, tpu.core_type = #tpu.core_type<tc>, window_params = [{transform_indices = @transform_0, window_bounds = array<i64: 1>}, {transform_indices = @transform_1, window_bounds = array<i64: 8, 512>}, {transform_indices = @transform_2, window_bounds = array<i64: 8, 512>}, {transform_indices = @transform_3, window_bounds = array<i64: 8, 512>}]} {
    %c0 = arith.constant 0 : index
    %0 = memref.load %arg1[%c0] : memref<1xf32, #tpu.memory_space<smem>>
    %c0_0 = arith.constant 0 : index
    %c0_1 = arith.constant 0 : index
    %1 = vector.load %arg2[%c0_0, %c0_1] : memref<8x512xf32, #tpu.memory_space<vmem>>, vector<8x512xf32>
    %2 = vector.broadcast %0 : f32 to vector<8x512xf32>
    %3 = arith.addf %1, %2 : vector<8x512xf32>
    %cst = arith.constant 0.000000e+00 : f32
    %cst_2 = arith.constant 1.000000e+00 : f32
    %4 = vector.broadcast %cst : f32 to vector<8x512xf32>
    %5 = arith.maximumf %4, %3 : vector<8x512xf32>
    %6 = vector.broadcast %cst_2 : f32 to vector<8x512xf32>
    %7 = arith.minimumf %6, %5 : vector<8x512xf32>
    %c0_3 = arith.constant 0 : index
    %c0_4 = arith.constant 0 : index
    %8 = vector.load %arg3[%c0_3, %c0_4] : memref<8x512xf32, #tpu.memory_space<vmem>>, vector<8x512xf32>
    tpu.vector_store %arg3[%c0_3, %c0_4], %7 {strides = array<i32>} : memref<8x512xf32, #tpu.memory_space<vmem>>, vector<8x512xf32>,
    %9 = vector.broadcast %0 : f32 to vector<8x512xf32>
    %10 = arith.subf %1, %9 : vector<8x512xf32>
    %cst_5 = arith.constant 0.000000e+00 : f32
    %cst_6 = arith.constant 1.000000e+00 : f32
    %11 = vector.broadcast %cst_5 : f32 to vector<8x512xf32>
    %12 = arith.maximumf %11, %10 : vector<8x512xf32>
    %13 = vector.broadcast %cst_6 : f32 to vector<8x512xf32>
    %14 = arith.minimumf %13, %12 : vector<8x512xf32>
    %c0_7 = arith.constant 0 : index
    %c0_8 = arith.constant 0 : index
    %15 = vector.load %arg4[%c0_7, %c0_8] : memref<8x512xf32, #tpu.memory_space<vmem>>, vector<8x512xf32>
    tpu.vector_store %arg4[%c0_7, %c0_8], %14 {strides = array<i32>} : memref<8x512xf32, #tpu.memory_space<vmem>>, vector<8x512xf32>,
    return
  }
  func.func @transform_0(%arg0: i32) -> i32 {
    %c0_i32 = arith.constant 0 : i32
    %c0_i32_0 = arith.constant 0 : i32
    return %c0_i32 : i32
  }
  func.func @transform_1(%arg0: i32) -> (i32, i32) {
    %c0_i32 = arith.constant 0 : i32
    %c0_i32_0 = arith.constant 0 : i32
    return %arg0, %c0_i32 : i32, i32
  }
  func.func @transform_2(%arg0: i32) -> (i32, i32) {
    %c0_i32 = arith.constant 0 : i32
    %c0_i32_0 = arith.constant 0 : i32
    return %arg0, %c0_i32 : i32, i32
  }
  func.func @transform_3(%arg0: i32) -> (i32, i32) {
    %c0_i32 = arith.constant 0 : i32
    %c0_i32_0 = arith.constant 0 : i32
    return %arg0, %c0_i32 : i32, i32
  }
}

</mosaic_0001>

<llo_original>
// kernel: _forward_impl.1
$region0: #{_forward_impl.1}
  #allocation0 [shape = 'u32[]', space=smem, size = 0x4, offset = 0x4, fixed_abs, tag = 'smem constant byte address 0x4 - core index']
  #allocation1 [shape = 'u32[144,128]{1,0:T(1,128)}', space=vmem, size = 0x12000, scoped, tag = 'internal scratch']
  #allocation2 [shape = 'f32[1]{0:T(128)S(6)}', space=smem, size = 0x200, scoped, tag = 'scoped memory for _forward_impl.1']
  %s0 = inlined_call_operand.<no memory space> [shape: f32[1], index: 0, kind: input, shape index: {}]
  %s1 = inlined_call_operand.vmem [shape: f32[8,512], index: 1, kind: input, shape index: {}, may-alias: {1,2}]
  %s2 = inlined_call_operand.vmem [shape: f32[8,512], index: 2, kind: output, shape index: {0}, may-alias: {1,2}]
  %s3 = inlined_call_operand.vmem [shape: f32[8,512], index: 3, kind: output, shape index: {1}]
  %4 = xla_tuple %s2, %s3
  %s5 = sld [smem:[#allocation0]]
  $region26: #{_forward_impl.1} parent=0
    _
  %s7 = ssub.s32 1, %s5
  %s8 = scalar_select 0, %s7, %s5
  %9 = sst [smem:[#allocation2]] %s0
  // Predicated region
  $region2: #{_forward_impl.1} parent=0 // pred_check
    _
  $region3: #{_forward_impl.1} parent=0 // pred_check_branch
    %11 = sbr.rel (0) target = $region5
  $region4: #{_forward_impl.1} parent=0 // pred_region
    _
  $region5: #{_forward_impl.1} parent=0 // pred_fallthru
    _
  // Predicated region
  $region6: #{_forward_impl.1} parent=0 // pred_check
    _
  $region7: #{_forward_impl.1} parent=0 // pred_check_branch
    %13 = sbr.rel (0) target = $region9
  $region8: #{_forward_impl.1} parent=0 // pred_region
    _
  $region9: #{_forward_impl.1} parent=0 // pred_fallthru
    _
  %s14 = sld [smem:[#allocation2]]
  %v15 = vld [vmem:[%s1] sm:$0xff]
  %v16 = vld [vmem:[%s1 + $0x8] sm:$0xff]
  %v17 = vld [vmem:[%s1 + $0x10] sm:$0xff]
  %v18 = vld [vmem:[%s1 + $0x18] sm:$0xff]
  %v19 = vstv %s14
  %v20 = vadd.f32 %v15, %v19
  %v21 = vadd.f32 %v16, %v19
  %v22 = vadd.f32 %v17, %v19
  %v23 = vadd.f32 %v18, %v19
  %v24 = vmax.f32 %v20, 0.0
  %v25 = vmax.f32 %v21, 0.0
  %v26 = vmax.f32 %v22, 0.0
  %v27 = vmax.f32 %v23, 0.0
  %v28 = vmin.f32 %v24, 1.0
  %v29 = vmin.f32 %v25, 1.0
  %v30 = vmin.f32 %v26, 1.0
  %v31 = vmin.f32 %v27, 1.0
  %32 = vst [vmem:[%s2] sm:$0xff] %v28
  %33 = vst [vmem:[%s2 + $0x8] sm:$0xff] %v29
  %34 = vst [vmem:[%s2 + $0x10] sm:$0xff] %v30
  %35 = vst [vmem:[%s2 + $0x18] sm:$0xff] %v31
  %v36 = vsub.f32 %v15, %v19
  %v37 = vsub.f32 %v16, %v19
  %v38 = vsub.f32 %v17, %v19
  %v39 = vsub.f32 %v18, %v19
  %v40 = vmax.f32 %v36, 0.0
  %v41 = vmax.f32 %v37, 0.0
  %v42 = vmax.f32 %v38, 0.0
  %v43 = vmax.f32 %v39, 0.0
  %v44 = vmin.f32 %v40, 1.0
  %v45 = vmin.f32 %v41, 1.0
  %v46 = vmin.f32 %v42, 1.0
  %v47 = vmin.f32 %v43, 1.0
  %48 = vst [vmem:[%s3] sm:$0xff] %v44
  %49 = vst [vmem:[%s3 + $0x8] sm:$0xff] %v45
  %50 = vst [vmem:[%s3 + $0x10] sm:$0xff] %v46
  %51 = vst [vmem:[%s3 + $0x18] sm:$0xff] %v47
  // Predicated region
  $region10: #{_forward_impl.1} parent=0 // pred_check
    _
  $region11: #{_forward_impl.1} parent=0 // pred_check_branch
    %53 = sbr.rel (0) target = $region13
  $region12: #{_forward_impl.1} parent=0 // pred_region
    _
  $region13: #{_forward_impl.1} parent=0 // pred_fallthru
    _
  // Predicated region
  $region14: #{_forward_impl.1} parent=0 // pred_check
    _
  $region15: #{_forward_impl.1} parent=0 // pred_check_branch
    %55 = sbr.rel (0) target = $region17
  $region16: #{_forward_impl.1} parent=0 // pred_region
    _
  $region17: #{_forward_impl.1} parent=0 // pred_fallthru
    _
  // Predicated region
  $region18: #{_forward_impl.1} parent=0 // pred_check
    _
  $region19: #{_forward_impl.1} parent=0 // pred_check_branch
    %57 = sbr.rel (0) target = $region21
  $region20: #{_forward_impl.1} parent=0 // pred_region
    _
  $region21: #{_forward_impl.1} parent=0 // pred_fallthru
    _
  // Predicated region
  $region22: #{_forward_impl.1} parent=0 // pred_check
    _
  $region23: #{_forward_impl.1} parent=0 // pred_check_branch
    %59 = sbr.rel (0) target = $region25
  $region24: #{_forward_impl.1} parent=0 // pred_region
    _
  $region25: #{_forward_impl.1} parent=0 // pred_fallthru
    _

</llo_original>
